<compile_context>
chip_gen: v5e
topology: v5e:2x2
jax: 0.10.0
libtpu: 0.0.40
codegen_flags: <defaults>
</compile_context>

<pallas_src>
import functools

import jax
import jax.numpy as jnp
from jax import lax
from jax.experimental import pallas as pl
from jax.experimental.pallas import tpu as pltpu

_LANE = 128
_CHUNK_ROWS = 512            # rows per in-kernel accumulation chunk (256 KiB f32 temporaries)
_MAX_TILE_ROWS = 4096        # 2 MiB f32/input buffer; 2 inputs x 2 pipeline buffers = 8 MiB
_PALLAS_MIN_ELEMS = 32 * 1024      # below ~128 KiB f32, XLA's fused reduce beats a kernel launch
_VMEM_LIMIT_BYTES = 32 * 1024 * 1024  # > v5e 16 MiB scoped default, <= physical VMEM on all gens


def _round_up(x, m):
    return (x + m - 1) // m * m


def _sq_abs_sum_kernel(f_ref, t_ref, sq_ref, abs_ref, *,
                       tile_rows, chunk_rows, spc, nblocks,
                       total_rows, need_row_mask, has_phantom):
    """One grid step: stream one (tile_rows, 128) block in 512-row chunks and
    accumulate (f-t)^2 / |f-t| partial sums into this core's resident
    (1, 8, 128) output blocks."""
    c = pl.program_id(0)           # TensorCore split ("parallel" axis)
    i = pl.program_id(1)           # streaming step within this core's row range
    blk = c * spc + i              # global block id; equals nblocks on the phantom step

    @pl.when(i == 0)
    def _init():
        sq_ref[...] = jnp.zeros_like(sq_ref)
        abs_ref[...] = jnp.zeros_like(abs_ref)

    n_chunks = tile_rows // chunk_rows

    def _accumulate(masked):
        if masked:
            # Scalar-unit bound for this (final, ragged) block; iota hoisted
            # out of the chunk loop (loop-invariant).
            valid_rows = total_rows - blk * tile_rows
            base_iota = lax.broadcasted_iota(jnp.int32, (chunk_rows, _LANE), 0)

        def body(k, carry):
            sq_acc, abs_acc = carry
            off = pl.multiple_of(k * chunk_rows, chunk_rows)
            d = (f_ref[pl.ds(off, chunk_rows), :].astype(jnp.float32)
                 - t_ref[pl.ds(off, chunk_rows), :].astype(jnp.float32))
            if masked:
                # Rows past the array end hold unspecified data; zero them
                # before they enter either sum (also squashes NaN garbage).
                d = jnp.where(base_iota < valid_rows - off, d, 0.0)
            d3 = d.reshape(chunk_rows // 8, 8, _LANE)
            return (sq_acc + jnp.sum(d3 * d3, axis=0),
                    abs_acc + jnp.sum(jnp.abs(d3), axis=0))

        zero = jnp.zeros((8, _LANE), jnp.float32)
        sq, ab = lax.fori_loop(0, n_chunks, body, (zero, zero), unroll=True)
        sq_ref[0] += sq
        abs_ref[0] += ab

    if need_row_mask:
        # Only the final real block pays the mask; the hot loop stays unmasked.
        @pl.when(blk < nblocks - 1)
        def _full():
            _accumulate(False)

        @pl.when(blk == nblocks - 1)
        def _tail():
            _accumulate(True)
    elif has_phantom:
        # Odd block count split over 2 cores: core 1's last step is a clamped
        # duplicate of the final block; skip its contribution entirely.
        @pl.when(blk < nblocks)
        def _full():
            _accumulate(False)
    else:
        _accumulate(False)


@jax.jit
def _field_error_sums(field, target):
    """Returns (sum((f-t)^2), sum(|f-t|)) in one fused Pallas streaming pass."""
    assert field.size == target.size
    f = field.reshape(-1)
    t = target.reshape(-1)
    n = f.shape[0]

    # Tiny heads: skip the Mosaic custom-call launch; XLA fuses this anyway.
    if n < _PALLAS_MIN_ELEMS:
        d = f.astype(jnp.float32) - t.astype(jnp.float32)
        return jnp.sum(d * d), jnp.sum(jnp.abs(d))

    rows = pl.cdiv(n, _LANE)
    pad = rows * _LANE - n
    if pad:
        # TODO(synk): a fully copy-free ragged lane tail would need a 1-D
        # masked tail kernel; lane-aligned inputs (the common conv-head case)
        # skip this branch and the reshape below is free.
        f = jnp.pad(f, (0, pad))
        t = jnp.pad(t, (0, pad))
    f2 = f.reshape(rows, _LANE)
    t2 = t.reshape(rows, _LANE)

    # Packed-dtype minimum sublane tile: f32 -> 8, bf16 -> 16, int8/fp8 -> 32.
    itemsize = min(field.dtype.itemsize, target.dtype.itemsize)
    row_align = max(8, 32 // itemsize)

    if rows <= _CHUNK_ROWS:
        tile_rows = _round_up(rows, row_align)   # single block, single chunk
        chunk_rows = tile_rows
    else:
        tile_rows = min(_MAX_TILE_ROWS, _round_up(rows, _CHUNK_ROWS))
        chunk_rows = _CHUNK_ROWS

    nblocks = pl.cdiv(rows, tile_rows)
    need_row_mask = (nblocks * tile_rows != rows)
    # Split the block range across v7x's two TensorCores; on 1-TC chips this
    # is a harmless serial 2-way split.  Each core gets its OWN accumulator.
    num_cores = 2 if nblocks >= 2 else 1
    spc = pl.cdiv(nblocks, num_cores)            # grid steps per core
    has_phantom = (num_cores * spc != nblocks)   # odd block count -> one clamped step

    if has_phantom:
        def blk_map(c, i):
            return (jnp.minimum(c * spc + i, nblocks - 1), 0)
    else:
        def blk_map(c, i):
            return (c * spc + i, 0)

    kernel = functools.partial(
        _sq_abs_sum_kernel,
        tile_rows=tile_rows, chunk_rows=chunk_rows, spc=spc, nblocks=nblocks,
        total_rows=rows, need_row_mask=need_row_mask, has_phantom=has_phantom)

    sq_part, abs_part = pl.pallas_call(
        kernel,
        out_shape=(
            jax.ShapeDtypeStruct((num_cores, 8, _LANE), jnp.float32),
            jax.ShapeDtypeStruct((num_cores, 8, _LANE), jnp.float32),
        ),
        grid_spec=pltpu.PrefetchScalarGridSpec(
            num_scalar_prefetch=0,
            grid=(num_cores, spc),
            in_specs=[
                pl.BlockSpec((tile_rows, _LANE), blk_map),
                pl.BlockSpec((tile_rows, _LANE), blk_map),
            ],
            out_specs=[
                pl.BlockSpec((1, 8, _LANE), lambda c, i: (c, 0, 0)),
                pl.BlockSpec((1, 8, _LANE), lambda c, i: (c, 0, 0)),
            ],
        ),
        compiler_params=pltpu.CompilerParams(
            dimension_semantics=("parallel", "arbitrary"),
            vmem_limit_bytes=_VMEM_LIMIT_BYTES),
    )(f2, t2)

    # TODO(synk): a last-step in-kernel XLU reduce to two SMEM scalars would
    # drop these two tiny writebacks; kept in plain JAX for lowering safety.
    return jnp.sum(sq_part), jnp.sum(abs_part)


def make_composite_loss(scale):
    """Synthetic analogue of an openpifpaf composite sub-loss.

    Each sub-loss returns TWO scalar components (an MSE-like and an L1-like
    term), matching the "flat list of components" structure MultiHeadLoss
    consumes.  `scale` is a deterministic stand-in for internal weights.
    """
    def loss_fn(field, target):
        n = float(field.size)
        sq_sum, abs_sum = _field_error_sums(field, target)
        return [scale * sq_sum / n, scale * abs_sum / n]
    return loss_fn


class MultiHeadLoss:
    """JAX port of openpifpaf MultiHeadLoss.forward."""

    def __init__(self, losses, lambdas):
        self.losses = list(losses)
        self.losses_pifpaf = self.losses[:2]
        self.losses_crm = self.losses[2:]
        self.lambdas = list(lambdas)

    def __call__(self, head_fields, head_targets, head):
        # TODO(synk): batching all same-shape sub-losses of a head into one
        # pallas_call (extra operands + per-pair accumulator blocks) would
        # remove per-sub-loss launch overhead; per-head launches are retained
        # because they keep the streaming copy-free and tiny heads already
        # bypass Pallas entirely.
        if head == 'pifpaf':
            assert len(self.losses_pifpaf) == len(head_fields)
            assert len(self.losses_pifpaf) <= len(head_targets)
            flat_head_losses = [
                ll
                for l, f, t in zip(self.losses_pifpaf, head_fields, head_targets)
                for ll in l(f, t)
            ]
            assert len(self.lambdas) == len(flat_head_losses)
            loss_values = [
                lam * l
                for lam, l in zip(self.lambdas, flat_head_losses)
                if l is not None
            ]
            total_loss = sum(loss_values) if loss_values else None
        elif head == 'crm':
            assert len(self.losses_crm) == len(head_fields)
            assert len(self.losses_crm) <= len(head_targets)
            flat_head_losses = [
                ll
                for l, f, t in zip(self.losses_crm, head_fields, head_targets)
                for ll in l(f, t)
            ]
            loss_values = [0.2 * l for l in flat_head_losses if l is not None]
            total_loss = sum(loss_values) if loss_values else None
        else:
            raise ValueError(f"unknown head {head!r}")
        return (total_loss, flat_head_losses)


if __name__ == "__main__":
    key = jax.random.PRNGKey(0)

    # Deterministic "parameters" for the three sub-losses
    # (2 pifpaf sub-losses + 1 crm sub-loss), and lambdas for the 4
    # pifpaf components (2 sub-losses x 2 components each).
    losses = [make_composite_loss(1.0),
              make_composite_loss(0.5),
              make_composite_loss(2.0)]
    lambdas = [1.0, 0.5, 2.0, 0.25]
    mhl = MultiHeadLoss(losses, lambdas)

    # pifpaf heads: (B, 17 keypoint channels, 32, 32) -> 34816 elements each,
    # large enough to exercise the single-block Pallas path.  crm head is a
    # tiny (2, 4, 16, 16) field that takes the plain-jnp fast path.
    pifpaf_shape = (2, 17, 32, 32)
    crm_shape = (2, 4, 16, 16)
    keys = jax.random.split(key, 8)
    pifpaf_fields = [jax.random.normal(keys[0], pifpaf_shape, jnp.float32),
                     jax.random.normal(keys[1], pifpaf_shape, jnp.float32)]
    pifpaf_targets = [jax.random.normal(keys[2], pifpaf_shape, jnp.float32),
                      jax.random.normal(keys[3], pifpaf_shape, jnp.float32)]
    crm_fields = [jax.random.normal(keys[4], crm_shape, jnp.float32)]
    crm_targets = [jax.random.normal(keys[5], crm_shape, jnp.float32)]

    total_pifpaf, flat_pifpaf = mhl(pifpaf_fields, pifpaf_targets, 'pifpaf')
    total_crm, flat_crm = mhl(crm_fields, crm_targets, 'crm')
    jax.block_until_ready((total_pifpaf, flat_pifpaf, total_crm, flat_crm))

    # Sanity check against a pure-JAX reference.
    def ref_components(scale, f, t):
        d = f - t
        return [scale * jnp.mean(d * d), scale * jnp.mean(jnp.abs(d))]

    ref_flat = (ref_components(1.0, pifpaf_fields[0], pifpaf_targets[0])
                + ref_components(0.5, pifpaf_fields[1], pifpaf_targets[1]))
    ref_total = sum(lam * l for lam, l in zip(lambdas, ref_flat))
    assert jnp.allclose(total_pifpaf, ref_total, rtol=1e-4, atol=1e-4)

    ref_crm_flat = ref_components(2.0, crm_fields[0], crm_targets[0])
    ref_crm_total = sum(0.2 * l for l in ref_crm_flat)
    assert jnp.allclose(total_crm, ref_crm_total, rtol=1e-4, atol=1e-4)

    # Direct check of the streaming path: ragged lane tail + ragged final
    # block (masked) + odd block count split over the 2-core grid (phantom
    # step) at 4096-row tiles.
    big_n = 6 * _MAX_TILE_ROWS * _LANE + 789        # -> 7 blocks, all edge cases
    kb1, kb2 = jax.random.split(keys[6])
    xb = jax.random.normal(kb1, (big_n,), jnp.float32)
    yb = jax.random.normal(kb2, (big_n,), jnp.float32)
    sq_big, abs_big = _field_error_sums(xb, yb)
    jax.block_until_ready((sq_big, abs_big))
    db = xb - yb
    assert jnp.allclose(sq_big, jnp.sum(db * db), rtol=5e-4)
    assert jnp.allclose(abs_big, jnp.sum(jnp.abs(db)), rtol=5e-4)

    print("KERNEL_OK")
</pallas_src>

<mosaic_0001>
module attributes {stable_mosaic.version = 11 : i64} {
  func.func @_sq_abs_sum_kernel(%arg0: i32, %arg1: i32, %arg2: memref<272x128xf32, #tpu.memory_space<vmem>>, %arg3: memref<272x128xf32, #tpu.memory_space<vmem>>, %arg4: memref<1x8x128xf32, #tpu.memory_space<vmem>>, %arg5: memref<1x8x128xf32, #tpu.memory_space<vmem>>) attributes {dimension_semantics = [#tpu.dimension_semantics<parallel>, #tpu.dimension_semantics<arbitrary>], iteration_bounds = array<i64: 1, 1>, scalar_prefetch = 0 : i64, scratch_operands = 0 : i64, tpu.core_type = #tpu.core_type<tc>, window_params = [{transform_indices = @transform_0, window_bounds = array<i64: 272, 128>}, {transform_indices = @transform_1, window_bounds = array<i64: 272, 128>}, {transform_indices = @transform_2, window_bounds = array<i64: 1, 8, 128>}, {transform_indices = @transform_3, window_bounds = array<i64: 1, 8, 128>}]} {
    %c0_i32 = arith.constant 0 : i32
    %0 = arith.cmpi eq, %arg1, %c0_i32 : i32
    %1 = arith.extui %0 : i1 to i32
    %c0_i32_0 = arith.constant 0 : i32
    %2 = arith.cmpi ne, %1, %c0_i32_0 : i32
    scf.if %2 {
      %cst_17 = arith.constant 0.000000e+00 : f32
      %30 = vector.broadcast %cst_17 : f32 to vector<1x8x128xf32>
      %c0_18 = arith.constant 0 : index
      %c0_19 = arith.constant 0 : index
      %c0_20 = arith.constant 0 : index
      %31 = vector.load %arg4[%c0_18, %c0_19, %c0_20] : memref<1x8x128xf32, #tpu.memory_space<vmem>>, vector<1x8x128xf32>
      tpu.vector_store %arg4[%c0_18, %c0_19, %c0_20], %30 {strides = array<i32>} : memref<1x8x128xf32, #tpu.memory_space<vmem>>, vector<1x8x128xf32>,
      %cst_21 = arith.constant 0.000000e+00 : f32
      %32 = vector.broadcast %cst_21 : f32 to vector<1x8x128xf32>
      %c0_22 = arith.constant 0 : index
      %c0_23 = arith.constant 0 : index
      %c0_24 = arith.constant 0 : index
      %33 = vector.load %arg5[%c0_22, %c0_23, %c0_24] : memref<1x8x128xf32, #tpu.memory_space<vmem>>, vector<1x8x128xf32>
      tpu.vector_store %arg5[%c0_22, %c0_23, %c0_24], %32 {strides = array<i32>} : memref<1x8x128xf32, #tpu.memory_space<vmem>>, vector<1x8x128xf32>,
    } else {
    }
    %cst = arith.constant 0.000000e+00 : f32
    %3 = vector.broadcast %cst : f32 to vector<8x128xf32>
    %c0_i32_1 = arith.constant 0 : i32
    %c272_i32 = arith.constant 272 : i32
    %4 = arith.muli %c0_i32_1, %c272_i32 : i32
    %5 = tpu.assume_multiple %4, 272 : i32
    %6 = arith.index_cast %5 : i32 to index
    %c0 = arith.constant 0 : index
    %7 = vector.load %arg2[%6, %c0] : memref<272x128xf32, #tpu.memory_space<vmem>>, vector<272x128xf32>
    %8 = arith.index_cast %5 : i32 to index
    %c0_2 = arith.constant 0 : index
    %9 = vector.load %arg3[%8, %c0_2] : memref<272x128xf32, #tpu.memory_space<vmem>>, vector<272x128xf32>
    %10 = arith.subf %7, %9 : vector<272x128xf32>
    %11 = vector.shape_cast %10 : vector<272x128xf32> to vector<34x8x128xf32>
    %12 = arith.mulf %11, %11 : vector<34x8x128xf32>
    %cst_3 = arith.constant dense<0.000000e+00> : vector<8x128xf32>
    %13 = vector.multi_reduction <add>, %12, %cst_3 [0] : vector<34x8x128xf32> to vector<8x128xf32>
    %14 = arith.addf %3, %13 : vector<8x128xf32>
    %15 = math.absf %11 : vector<34x8x128xf32>
    %cst_4 = arith.constant dense<0.000000e+00> : vector<8x128xf32>
    %16 = vector.multi_reduction <add>, %15, %cst_4 [0] : vector<34x8x128xf32> to vector<8x128xf32>
    %17 = arith.addf %3, %16 : vector<8x128xf32>
    %c1_i32 = arith.constant 1 : i32
    %c0_5 = arith.constant 0 : index
    %c0_6 = arith.constant 0 : index
    %c0_7 = arith.constant 0 : index
    %18 = vector.load %arg4[%c0_5, %c0_6, %c0_7] : memref<1x8x128xf32, #tpu.memory_space<vmem>>, vector<1x8x128xf32>
    %19 = vector.shape_cast %18 : vector<1x8x128xf32> to vector<8x128xf32>
    %20 = arith.addf %19, %14 : vector<8x128xf32>
    %c0_8 = arith.constant 0 : index
    %c0_9 = arith.constant 0 : index
    %c0_10 = arith.constant 0 : index
    %21 = vector.load %arg4[%c0_8, %c0_9, %c0_10] : memref<1x8x128xf32, #tpu.memory_space<vmem>>, vector<1x8x128xf32>
    %22 = vector.shape_cast %21 : vector<1x8x128xf32> to vector<8x128xf32>
    %23 = vector.shape_cast %20 : vector<8x128xf32> to vector<1x8x128xf32>
    tpu.vector_store %arg4[%c0_8, %c0_9, %c0_10], %23 {strides = array<i32>} : memref<1x8x128xf32, #tpu.memory_space<vmem>>, vector<1x8x128xf32>,
    %c0_11 = arith.constant 0 : index
    %c0_12 = arith.constant 0 : index
    %c0_13 = arith.constant 0 : index
    %24 = vector.load %arg5[%c0_11, %c0_12, %c0_13] : memref<1x8x128xf32, #tpu.memory_space<vmem>>, vector<1x8x128xf32>
    %25 = vector.shape_cast %24 : vector<1x8x128xf32> to vector<8x128xf32>
    %26 = arith.addf %25, %17 : vector<8x128xf32>
    %c0_14 = arith.constant 0 : index
    %c0_15 = arith.constant 0 : index
    %c0_16 = arith.constant 0 : index
    %27 = vector.load %arg5[%c0_14, %c0_15, %c0_16] : memref<1x8x128xf32, #tpu.memory_space<vmem>>, vector<1x8x128xf32>
    %28 = vector.shape_cast %27 : vector<1x8x128xf32> to vector<8x128xf32>
    %29 = vector.shape_cast %26 : vector<8x128xf32> to vector<1x8x128xf32>
    tpu.vector_store %arg5[%c0_14, %c0_15, %c0_16], %29 {strides = array<i32>} : memref<1x8x128xf32, #tpu.memory_space<vmem>>, vector<1x8x128xf32>,
    return
  }
  func.func @transform_0(%arg0: i32, %arg1: i32) -> (i32, i32) {
    %c1_i32 = arith.constant 1 : i32
    %0 = arith.muli %arg0, %c1_i32 : i32
    %1 = arith.addi %0, %arg1 : i32
    %c0_i32 = arith.constant 0 : i32
    %c0_i32_0 = arith.constant 0 : i32
    return %1, %c0_i32 : i32, i32
  }
  func.func @transform_1(%arg0: i32, %arg1: i32) -> (i32, i32) {
    %c1_i32 = arith.constant 1 : i32
    %0 = arith.muli %arg0, %c1_i32 : i32
    %1 = arith.addi %0, %arg1 : i32
    %c0_i32 = arith.constant 0 : i32
    %c0_i32_0 = arith.constant 0 : i32
    return %1, %c0_i32 : i32, i32
  }
  func.func @transform_2(%arg0: i32, %arg1: i32) -> (i32, i32, i32) {
    %c0_i32 = arith.constant 0 : i32
    %c0_i32_0 = arith.constant 0 : i32
    %c0_i32_1 = arith.constant 0 : i32
    return %arg0, %c0_i32, %c0_i32_0 : i32, i32, i32
  }
  func.func @transform_3(%arg0: i32, %arg1: i32) -> (i32, i32, i32) {
    %c0_i32 = arith.constant 0 : i32
    %c0_i32_0 = arith.constant 0 : i32
    %c0_i32_1 = arith.constant 0 : i32
    return %arg0, %c0_i32, %c0_i32_0 : i32, i32, i32
  }
}

</mosaic_0001>

<llo_original>
// kernel: _field_error_sums.1
$region0: #{_field_error_sums.1}
  #allocation0 [shape = 'u32[]', space=smem, size = 0x4, offset = 0x4, fixed_abs, tag = 'smem constant byte address 0x4 - core index']
  #allocation1 [shape = 'u32[72,128]{1,0:T(1,128)}', space=vmem, size = 0x9000, scoped, tag = 'internal scratch']
  %s0 = inlined_call_operand.vmem [shape: f32[272,128], index: 0, kind: input, shape index: {}]
  %s1 = inlined_call_operand.vmem [shape: f32[272,128], index: 1, kind: input, shape index: {}]
  %s2 = inlined_call_operand.vmem [shape: f32[1,8,128], index: 2, kind: output, shape index: {0}]
  %s3 = inlined_call_operand.vmem [shape: f32[1,8,128], index: 3, kind: output, shape index: {1}]
  %4 = xla_tuple %s2, %s3
  %s5 = sld [smem:[#allocation0]]
  $region30: #{_field_error_sums.1} parent=0
    _
  %s7 = ssub.s32 1, %s5
  %s8 = scalar_select 0, %s7, %s5
  // Predicated region
  $region2: #{_field_error_sums.1} parent=0 // pred_check
    _
  $region3: #{_field_error_sums.1} parent=0 // pred_check_branch
    %10 = sbr.rel (0) target = $region5
  $region4: #{_field_error_sums.1} parent=0 // pred_region
    %s11 = sadd.s32 0, 0
    %s12 = smul.u32 34, %s11
    %p13 = scmp.lt.s32.totalorder %s12, 33
    %s14 = scalar_select %p13, %s12, 33
    %s15 = smul.addr %s14, 8
    %s16 = scalar_lea.vmem %s0, %s15
    %s17 = sadd.s32 0, 0
    %s18 = smul.u32 34, %s17
  $region5: #{_field_error_sums.1} parent=0 // pred_fallthru
    _
  // Predicated region
  $region6: #{_field_error_sums.1} parent=0 // pred_check
    _
  $region7: #{_field_error_sums.1} parent=0 // pred_check_branch
    %20 = sbr.rel (0) target = $region9
  $region8: #{_field_error_sums.1} parent=0 // pred_region
    %s21 = sadd.s32 0, 0
    %s22 = smul.u32 34, %s21
    %p23 = scmp.lt.s32.totalorder %s22, 33
    %s24 = scalar_select %p23, %s22, 33
    %s25 = smul.addr %s24, 8
    %s26 = scalar_lea.vmem %s1, %s25
    %s27 = sadd.s32 0, 0
    %s28 = smul.u32 34, %s27
  $region9: #{_field_error_sums.1} parent=0 // pred_fallthru
    _
  %s29 = sadd.s32 0, 0
  %s30 = smul.u32 34, %s29
  %p31 = scmp.lt.s32.totalorder %s30, 33
  %s32 = scalar_select %p31, %s30, 33
  %s33 = smul.addr %s32, 8
  %s34 = scalar_lea.vmem %s0, %s33
  %s35 = sadd.s32 0, 0
  %s36 = smul.u32 34, %s35
  %p37 = scmp.lt.s32.totalorder %s36, 33
  %s38 = scalar_select %p37, %s36, 33
  %s39 = smul.addr %s38, 8
  %s40 = scalar_lea.vmem %s1, %s39
  %s41 = sadd.s32 0, 0
  %s42 = smul.u32 34, %s41
  %p43 = scmp.lt.s32.totalorder %s42, 33
  %s44 = scalar_select %p43, %s42, 33
  %s45 = smul.addr %s44, 8
  %s46 = scalar_lea.vmem %s0, %s45
  %s47 = sadd.s32 0, 0
  %s48 = smul.u32 34, %s47
  %s49 = sadd.s32 0, 0
  %s50 = smul.u32 34, %s49
  %p51 = scmp.lt.s32.totalorder %s50, 33
  %s52 = scalar_select %p51, %s50, 33
  %s53 = smul.addr %s52, 8
  %s54 = scalar_lea.vmem %s1, %s53
  %s55 = sadd.s32 0, 0
  %s56 = smul.u32 34, %s55
  %p57 = scmp.eq.s32.totalorder 0, 0
  // Predicated region
  $region10: #{_field_error_sums.1} parent=0 // pred_check
    %p58 = pneg %p57
  $region11: #{_field_error_sums.1} parent=0 // pred_check_branch
    %60 = sbr.rel (%p58) target = $region13
  $region12: #{_field_error_sums.1} parent=0 // pred_region
    %61 = vst [vmem:[%s2] sm:$0xff] 0.0
    %62 = vst [vmem:[%s3] sm:$0xff] 0.0
  $region13: #{_field_error_sums.1} parent=0 // pred_fallthru
    _
  %v63 = vld [vmem:[%s46] sm:$0xff]
  %v64 = vld [vmem:[%s46 + $0x8] sm:$0xff]
  %v65 = vld [vmem:[%s46 + $0x10] sm:$0xff]
  %v66 = vld [vmem:[%s46 + $0x18] sm:$0xff]
  %v67 = vld [vmem:[%s46 + $0x20] sm:$0xff]
  %v68 = vld [vmem:[%s46 + $0x28] sm:$0xff]
  %v69 = vld [vmem:[%s46 + $0x30] sm:$0xff]
  %v70 = vld [vmem:[%s46 + $0x38] sm:$0xff]
  %v71 = vld [vmem:[%s46 + $0x40] sm:$0xff]
  %v72 = vld [vmem:[%s46 + $0x48] sm:$0xff]
  %v73 = vld [vmem:[%s46 + $0x50] sm:$0xff]
  %v74 = vld [vmem:[%s46 + $0x58] sm:$0xff]
  %v75 = vld [vmem:[%s46 + $0x60] sm:$0xff]
  %v76 = vld [vmem:[%s46 + $0x68] sm:$0xff]
  %v77 = vld [vmem:[%s46 + $0x70] sm:$0xff]
  %v78 = vld [vmem:[%s46 + $0x78] sm:$0xff]
  %v79 = vld [vmem:[%s46 + $0x80] sm:$0xff]
  %v80 = vld [vmem:[%s46 + $0x88] sm:$0xff]
  %v81 = vld [vmem:[%s46 + $0x90] sm:$0xff]
  %v82 = vld [vmem:[%s46 + $0x98] sm:$0xff]
  %v83 = vld [vmem:[%s46 + $0xa0] sm:$0xff]
  %v84 = vld [vmem:[%s46 + $0xa8] sm:$0xff]
  %v85 = vld [vmem:[%s46 + $0xb0] sm:$0xff]
  %v86 = vld [vmem:[%s46 + $0xb8] sm:$0xff]
  %v87 = vld [vmem:[%s46 + $0xc0] sm:$0xff]
  %v88 = vld [vmem:[%s46 + $0xc8] sm:$0xff]
  %v89 = vld [vmem:[%s46 + $0xd0] sm:$0xff]
  %v90 = vld [vmem:[%s46 + $0xd8] sm:$0xff]
  %v91 = vld [vmem:[%s46 + $0xe0] sm:$0xff]
  %v92 = vld [vmem:[%s46 + $0xe8] sm:$0xff]
  %v93 = vld [vmem:[%s46 + $0xf0] sm:$0xff]
  %v94 = vld [vmem:[%s46 + $0xf8] sm:$0xff]
  %v95 = vld [vmem:[%s46 + $0x100] sm:$0xff]
  %v96 = vld [vmem:[%s46 + $0x108] sm:$0xff]
  %v97 = vld [vmem:[%s54] sm:$0xff]
  %v98 = vld [vmem:[%s54 + $0x8] sm:$0xff]
  %v99 = vld [vmem:[%s54 + $0x10] sm:$0xff]
  %v100 = vld [vmem:[%s54 + $0x18] sm:$0xff]
  %v101 = vld [vmem:[%s54 + $0x20] sm:$0xff]
  %v102 = vld [vmem:[%s54 + $0x28] sm:$0xff]
  %v103 = vld [vmem:[%s54 + $0x30] sm:$0xff]
  %v104 = vld [vmem:[%s54 + $0x38] sm:$0xff]
  %v105 = vld [vmem:[%s54 + $0x40] sm:$0xff]
  %v106 = vld [vmem:[%s54 + $0x48] sm:$0xff]
  %v107 = vld [vmem:[%s54 + $0x50] sm:$0xff]
  %v108 = vld [vmem:[%s54 + $0x58] sm:$0xff]
  %v109 = vld [vmem:[%s54 + $0x60] sm:$0xff]
  %v110 = vld [vmem:[%s54 + $0x68] sm:$0xff]
  %v111 = vld [vmem:[%s54 + $0x70] sm:$0xff]
  %v112 = vld [vmem:[%s54 + $0x78] sm:$0xff]
  %v113 = vld [vmem:[%s54 + $0x80] sm:$0xff]
  %v114 = vld [vmem:[%s54 + $0x88] sm:$0xff]
  %v115 = vld [vmem:[%s54 + $0x90] sm:$0xff]
  %v116 = vld [vmem:[%s54 + $0x98] sm:$0xff]
  %v117 = vld [vmem:[%s54 + $0xa0] sm:$0xff]
  %v118 = vld [vmem:[%s54 + $0xa8] sm:$0xff]
  %v119 = vld [vmem:[%s54 + $0xb0] sm:$0xff]
  %v120 = vld [vmem:[%s54 + $0xb8] sm:$0xff]
  %v121 = vld [vmem:[%s54 + $0xc0] sm:$0xff]
  %v122 = vld [vmem:[%s54 + $0xc8] sm:$0xff]
  %v123 = vld [vmem:[%s54 + $0xd0] sm:$0xff]
  %v124 = vld [vmem:[%s54 + $0xd8] sm:$0xff]
  %v125 = vld [vmem:[%s54 + $0xe0] sm:$0xff]
  %v126 = vld [vmem:[%s54 + $0xe8] sm:$0xff]
  %v127 = vld [vmem:[%s54 + $0xf0] sm:$0xff]
  %v128 = vld [vmem:[%s54 + $0xf8] sm:$0xff]
  %v129 = vld [vmem:[%s54 + $0x100] sm:$0xff]
  %v130 = vld [vmem:[%s54 + $0x108] sm:$0xff]
  %v131 = vsub.f32 %v63, %v97
  %v132 = vsub.f32 %v64, %v98
  %v133 = vsub.f32 %v65, %v99
  %v134 = vsub.f32 %v66, %v100
  %v135 = vsub.f32 %v67, %v101
  %v136 = vsub.f32 %v68, %v102
  %v137 = vsub.f32 %v69, %v103
  %v138 = vsub.f32 %v70, %v104
  %v139 = vsub.f32 %v71, %v105
  %v140 = vsub.f32 %v72, %v106
  %v141 = vsub.f32 %v73, %v107
  %v142 = vsub.f32 %v74, %v108
  %v143 = vsub.f32 %v75, %v109
  %v144 = vsub.f32 %v76, %v110
  %v145 = vsub.f32 %v77, %v111
  %v146 = vsub.f32 %v78, %v112
  %v147 = vsub.f32 %v79, %v113
  %v148 = vsub.f32 %v80, %v114
  %v149 = vsub.f32 %v81, %v115
  %v150 = vsub.f32 %v82, %v116
  %v151 = vsub.f32 %v83, %v117
  %v152 = vsub.f32 %v84, %v118
  %v153 = vsub.f32 %v85, %v119
  %v154 = vsub.f32 %v86, %v120
  %v155 = vsub.f32 %v87, %v121
  %v156 = vsub.f32 %v88, %v122
  %v157 = vsub.f32 %v89, %v123
  %v158 = vsub.f32 %v90, %v124
  %v159 = vsub.f32 %v91, %v125
  %v160 = vsub.f32 %v92, %v126
  %v161 = vsub.f32 %v93, %v127
  %v162 = vsub.f32 %v94, %v128
  %v163 = vsub.f32 %v95, %v129
  %v164 = vsub.f32 %v96, %v130
  %v165 = vmul.f32 %v131, %v131
  %v166 = vmul.f32 %v132, %v132
  %v167 = vmul.f32 %v133, %v133
  %v168 = vmul.f32 %v134, %v134
  %v169 = vmul.f32 %v135, %v135
  %v170 = vmul.f32 %v136, %v136
  %v171 = vmul.f32 %v137, %v137
  %v172 = vmul.f32 %v138, %v138
  %v173 = vmul.f32 %v139, %v139
  %v174 = vmul.f32 %v140, %v140
  %v175 = vmul.f32 %v141, %v141
  %v176 = vmul.f32 %v142, %v142
  %v177 = vmul.f32 %v143, %v143
  %v178 = vmul.f32 %v144, %v144
  %v179 = vmul.f32 %v145, %v145
  %v180 = vmul.f32 %v146, %v146
  %v181 = vmul.f32 %v147, %v147
  %v182 = vmul.f32 %v148, %v148
  %v183 = vmul.f32 %v149, %v149
  %v184 = vmul.f32 %v150, %v150
  %v185 = vmul.f32 %v151, %v151
  %v186 = vmul.f32 %v152, %v152
  %v187 = vmul.f32 %v153, %v153
  %v188 = vmul.f32 %v154, %v154
  %v189 = vmul.f32 %v155, %v155
  %v190 = vmul.f32 %v156, %v156
  %v191 = vmul.f32 %v157, %v157
  %v192 = vmul.f32 %v158, %v158
  %v193 = vmul.f32 %v159, %v159
  %v194 = vmul.f32 %v160, %v160
  %v195 = vmul.f32 %v161, %v161
  %v196 = vmul.f32 %v162, %v162
  %v197 = vmul.f32 %v163, %v163
  %v198 = vmul.f32 %v164, %v164
  %v199 = vadd.f32 %v165, %v166
  %v200 = vadd.f32 %v199, %v167
  %v201 = vadd.f32 %v200, %v168
  %v202 = vadd.f32 %v201, %v169
  %v203 = vadd.f32 %v202, %v170
  %v204 = vadd.f32 %v203, %v171
  %v205 = vadd.f32 %v204, %v172
  %v206 = vadd.f32 %v205, %v173
  %v207 = vadd.f32 %v206, %v174
  %v208 = vadd.f32 %v207, %v175
  %v209 = vadd.f32 %v208, %v176
  %v210 = vadd.f32 %v209, %v177
  %v211 = vadd.f32 %v210, %v178
  %v212 = vadd.f32 %v211, %v179
  %v213 = vadd.f32 %v212, %v180
  %v214 = vadd.f32 %v213, %v181
  %v215 = vadd.f32 %v214, %v182
  %v216 = vadd.f32 %v215, %v183
  %v217 = vadd.f32 %v216, %v184
  %v218 = vadd.f32 %v217, %v185
  %v219 = vadd.f32 %v218, %v186
  %v220 = vadd.f32 %v219, %v187
  %v221 = vadd.f32 %v220, %v188
  %v222 = vadd.f32 %v221, %v189
  %v223 = vadd.f32 %v222, %v190
  %v224 = vadd.f32 %v223, %v191
  %v225 = vadd.f32 %v224, %v192
  %v226 = vadd.f32 %v225, %v193
  %v227 = vadd.f32 %v226, %v194
  %v228 = vadd.f32 %v227, %v195
  %v229 = vadd.f32 %v228, %v196
  %v230 = vadd.f32 %v229, %v197
  %v231 = vadd.f32 %v230, %v198
  %v232 = vadd.f32 %v231, 0.0
  %v233 = vand.u32 2147483647, %v131
  %v234 = vand.u32 2147483647, %v132
  %v235 = vand.u32 2147483647, %v133
  %v236 = vand.u32 2147483647, %v134
  %v237 = vand.u32 2147483647, %v135
  %v238 = vand.u32 2147483647, %v136
  %v239 = vand.u32 2147483647, %v137
  %v240 = vand.u32 2147483647, %v138
  %v241 = vand.u32 2147483647, %v139
  %v242 = vand.u32 2147483647, %v140
  %v243 = vand.u32 2147483647, %v141
  %v244 = vand.u32 2147483647, %v142
  %v245 = vand.u32 2147483647, %v143
  %v246 = vand.u32 2147483647, %v144
  %v247 = vand.u32 2147483647, %v145
  %v248 = vand.u32 2147483647, %v146
  %v249 = vand.u32 2147483647, %v147
  %v250 = vand.u32 2147483647, %v148
  %v251 = vand.u32 2147483647, %v149
  %v252 = vand.u32 2147483647, %v150
  %v253 = vand.u32 2147483647, %v151
  %v254 = vand.u32 2147483647, %v152
  %v255 = vand.u32 2147483647, %v153
  %v256 = vand.u32 2147483647, %v154
  %v257 = vand.u32 2147483647, %v155
  %v258 = vand.u32 2147483647, %v156
  %v259 = vand.u32 2147483647, %v157
  %v260 = vand.u32 2147483647, %v158
  %v261 = vand.u32 2147483647, %v159
  %v262 = vand.u32 2147483647, %v160
  %v263 = vand.u32 2147483647, %v161
  %v264 = vand.u32 2147483647, %v162
  %v265 = vand.u32 2147483647, %v163
  %v266 = vand.u32 2147483647, %v164
  %v267 = vadd.f32 %v233, %v234
  %v268 = vadd.f32 %v267, %v235
  %v269 = vadd.f32 %v268, %v236
  %v270 = vadd.f32 %v269, %v237
  %v271 = vadd.f32 %v270, %v238
  %v272 = vadd.f32 %v271, %v239
  %v273 = vadd.f32 %v272, %v240
  %v274 = vadd.f32 %v273, %v241
  %v275 = vadd.f32 %v274, %v242
  %v276 = vadd.f32 %v275, %v243
  %v277 = vadd.f32 %v276, %v244
  %v278 = vadd.f32 %v277, %v245
  %v279 = vadd.f32 %v278, %v246
  %v280 = vadd.f32 %v279, %v247
  %v281 = vadd.f32 %v280, %v248
  %v282 = vadd.f32 %v281, %v249
  %v283 = vadd.f32 %v282, %v250
  %v284 = vadd.f32 %v283, %v251
  %v285 = vadd.f32 %v284, %v252
  %v286 = vadd.f32 %v285, %v253
  %v287 = vadd.f32 %v286, %v254
  %v288 = vadd.f32 %v287, %v255
  %v289 = vadd.f32 %v288, %v256
  %v290 = vadd.f32 %v289, %v257
  %v291 = vadd.f32 %v290, %v258
  %v292 = vadd.f32 %v291, %v259
  %v293 = vadd.f32 %v292, %v260
  %v294 = vadd.f32 %v293, %v261
  %v295 = vadd.f32 %v294, %v262
  %v296 = vadd.f32 %v295, %v263
  %v297 = vadd.f32 %v296, %v264
  %v298 = vadd.f32 %v297, %v265
  %v299 = vadd.f32 %v298, %v266
  %v300 = vadd.f32 %v299, 0.0
  %v301 = vld [vmem:[%s2] sm:$0xff]
  %v302 = vadd.f32 %v301, %v232
  %303 = vst [vmem:[%s2] sm:$0xff] %v302
  %v304 = vld [vmem:[%s3] sm:$0xff]
  %v305 = vadd.f32 %v304, %v300
  %306 = vst [vmem:[%s3] sm:$0xff] %v305
  // Predicated region
  $region14: #{_field_error_sums.1} parent=0 // pred_check
    _
  $region15: #{_field_error_sums.1} parent=0 // pred_check_branch
    %308 = sbr.rel (0) target = $region17
  $region16: #{_field_error_sums.1} parent=0 // pred_region
    _
  $region17: #{_field_error_sums.1} parent=0 // pred_fallthru
    _
  // Predicated region
  $region18: #{_field_error_sums.1} parent=0 // pred_check
    _
  $region19: #{_field_error_sums.1} parent=0 // pred_check_branch
    %310 = sbr.rel (0) target = $region21
  $region20: #{_field_error_sums.1} parent=0 // pred_region
    _
  $region21: #{_field_error_sums.1} parent=0 // pred_fallthru
    _
  // Predicated region
  $region22: #{_field_error_sums.1} parent=0 // pred_check
    _
  $region23: #{_field_error_sums.1} parent=0 // pred_check_branch
    %312 = sbr.rel (0) target = $region25
  $region24: #{_field_error_sums.1} parent=0 // pred_region
    _
  $region25: #{_field_error_sums.1} parent=0 // pred_fallthru
    _
  // Predicated region
  $region26: #{_field_error_sums.1} parent=0 // pred_check
    _
  $region27: #{_field_error_sums.1} parent=0 // pred_check_branch
    %314 = sbr.rel (0) target = $region29
  $region28: #{_field_error_sums.1} parent=0 // pred_region
    _
  $region29: #{_field_error_sums.1} parent=0 // pred_fallthru
    _

</llo_original>
